<compile_context>
chip_gen: v7x
topology: tpu7x:2x2x1
jax: 0.10.0
libtpu: 0.0.40
codegen_flags: <defaults>
</compile_context>

<pallas_src>
import math

import jax
import jax.numpy as jnp
from jax import lax
from jax.experimental import pallas as pl
from jax.experimental.pallas import tpu as pltpu

# EPFL node feature cardinalities; only the first two matter (i == 1 break).
FULL_NODE_FEATURE_DIMS = [16, 24]


def _round_up(a, b):
    return -(-a // b) * b


def _make_kernel(pack, v, v0, hilo):
    """Build the fused one-hot-matmul kernel.

    ids_ref : [TR, 2*pack] int32 — columns (2p, 2p+1) hold (id0, id1) of the
              node occupying slot p of each packed output row.
    w_refs  : 1 or 2 refs of shape [pack*V, pack*2D] — bf16 hi/lo split of the
              block-diagonal fused table (hilo=True) or a single f32 table.
    o_ref   : [TR, pack*2D] — full 128-lane rows when 2D divides 128.
    """

    def kernel(ids_ref, *refs):
        o_ref = refs[-1]
        w_refs = refs[:-1]
        ids = ids_ref[...]
        tr = ids.shape[0]
        kdim = w_refs[0].shape[0]                      # pack * V

        iota = lax.broadcasted_iota(jnp.int32, (tr, kdim), 1)
        match = None
        for p in range(pack):
            # In-kernel biasing: slot p occupies rows [p*V, (p+1)*V) of the
            # block-diagonal table; feature 1 rows start at p*V + V0.
            pos0 = ids[:, 2 * p:2 * p + 1] + (p * v)           # [TR, 1]
            pos1 = ids[:, 2 * p + 1:2 * p + 2] + (p * v + v0)  # [TR, 1]
            m = (iota == pos0) | (iota == pos1)
            match = m if match is None else (match | m)

        if hilo:
            # bf16 one-hot (0/1 exact) x bf16 hi/lo table, f32 accumulate.
            onehot = match.astype(jnp.bfloat16)
            acc = jnp.dot(onehot, w_refs[0][...],
                          preferred_element_type=jnp.float32)
            acc = acc + jnp.dot(onehot, w_refs[1][...],
                                preferred_element_type=jnp.float32)
        else:
            # Bit-faithful fallback: pinned-precision f32 matmul.
            onehot = match.astype(jnp.float32)
            acc = jnp.dot(onehot, w_refs[0][...],
                          preferred_element_type=jnp.float32,
                          precision=lax.Precision.HIGHEST)

        o_ref[...] = acc.astype(o_ref.dtype)

    return kernel


def make_node_encoder_2f(w0, w1, *, block_nodes=8192, out_dtype=jnp.float32,
                         exact=False):
    """Build the encoder.  w0: [V0, D], w1: [V1, D] f32.  Returns encode(x)."""
    v0, d = w0.shape
    v1, d1 = w1.shape
    assert d == d1, "both embeddings must share emb_dim // 2 columns"
    out_w = 2 * d
    v = v0 + v1

    # Pack as many nodes per output row as fit one 128-lane register row.
    pack = 128 // out_w if (out_w <= 128 and 128 % out_w == 0) else 1

    # Fused block-diagonal table, replicated block-diagonally `pack` times.
    # Built ONCE here (not per call).
    w_fused = jnp.zeros((v, out_w), jnp.float32)
    w_fused = w_fused.at[:v0, :d].set(w0.astype(jnp.float32))
    w_fused = w_fused.at[v0:, d:].set(w1.astype(jnp.float32))
    w_pack = jnp.kron(jnp.eye(pack, dtype=jnp.float32), w_fused)  # [pack*V, pack*2D]

    if exact:
        tables = (jax.device_put(w_pack),)
    else:
        w_hi = w_pack.astype(jnp.bfloat16)
        w_lo = (w_pack - w_hi.astype(jnp.float32)).astype(jnp.bfloat16)
        tables = (jax.device_put(w_hi), jax.device_put(w_lo))

    kernel = _make_kernel(pack, v, v0, hilo=not exact)
    kdim = pack * v
    lane_w = pack * out_w

    @jax.jit
    def encode(x):
        n, f = x.shape
        assert f == 2, "NodeEncoder_2f expects exactly two node features"

        # ---- tile selection (trace-time Python) -------------------------
        rows = -(-n // pack)
        rows_cap = max(8, (max(block_nodes // pack, 8) // 8) * 8)
        if rows <= 8:
            block_rows = rows                     # tiny input: one block
            rows_padded = rows
        else:
            # >= 2 grid steps, even count (balances v7x's two TensorCores on
            # the "parallel" axis), capped at rows_cap for VMEM.
            nblk = _round_up(max(2, -(-rows // rows_cap)), 2)
            block_rows = min(rows_cap, max(8, _round_up(-(-rows // nblk), 8)))
            rows_padded = _round_up(rows, block_rows)
        n_padded = rows_padded * pack

        # ---- id stream: pad + reshape only (biasing happens in-kernel) ---
        ids = x.astype(jnp.int32)
        if n_padded > n:
            ids = jnp.concatenate(
                [ids, jnp.zeros((n_padded - n, 2), jnp.int32)], axis=0)
        ids = ids.reshape(rows_padded, 2 * pack)

        out_packed = pl.pallas_call(
            kernel,
            out_shape=jax.ShapeDtypeStruct((rows_padded, lane_w), out_dtype),
            grid_spec=pl.GridSpec(
                grid=(rows_padded // block_rows,),
                in_specs=[pl.BlockSpec((block_rows, 2 * pack), lambda i: (i, 0))]
                + [pl.BlockSpec((kdim, lane_w), lambda i: (0, 0))] * len(tables),
                out_specs=pl.BlockSpec((block_rows, lane_w), lambda i: (i, 0)),
            ),
            compiler_params=pltpu.CompilerParams(
                dimension_semantics=("parallel",),
                vmem_limit_bytes=32 * 1024 * 1024),
        )(ids, *tables)

        # Free row-major reshape: row r holds nodes [r*pack, (r+1)*pack).
        return out_packed.reshape(n_padded, out_w)[:n]

    return encode


def xavier_uniform(key, shape):
    # torch.nn.init.xavier_uniform_ on a [V, D] weight: fan_in=D, fan_out=V.
    fan_out, fan_in = shape
    bound = math.sqrt(6.0 / (fan_in + fan_out))
    return jax.random.uniform(key, shape, jnp.float32, -bound, bound)


if __name__ == "__main__":
    emb_dim = 32
    d = emb_dim // 2           # per-feature embedding width (emb_dim / 2)

    key = jax.random.PRNGKey(0)
    k0, k1, kx0, kx1 = jax.random.split(key, 4)

    # Deterministic parameter init (synthetic, no checkpoint).
    w0 = xavier_uniform(k0, (FULL_NODE_FEATURE_DIMS[0], d))
    w1 = xavier_uniform(k1, (FULL_NODE_FEATURE_DIMS[1], d))

    encode = make_node_encoder_2f(w0, w1)

    # Small single-block case.
    n = 8
    ids0 = jax.random.randint(kx0, (n,), 0, FULL_NODE_FEATURE_DIMS[0], jnp.int32)
    ids1 = jax.random.randint(kx1, (n,), 0, FULL_NODE_FEATURE_DIMS[1], jnp.int32)
    x = jnp.stack([ids0, ids1], axis=1)
    out = jax.block_until_ready(encode(x))
    ref = jnp.concatenate([w0[x[:, 0]], w1[x[:, 1]]], axis=1)
    assert out.shape == (n, emb_dim), out.shape
    assert jnp.allclose(out, ref, atol=1e-5), "mismatch vs reference"

    # Multi-block (padded, grid >= 2, "parallel" axis) path.
    n2 = 40
    kx2, kx3 = jax.random.split(jax.random.PRNGKey(1))
    x2 = jnp.stack([
        jax.random.randint(kx2, (n2,), 0, FULL_NODE_FEATURE_DIMS[0], jnp.int32),
        jax.random.randint(kx3, (n2,), 0, FULL_NODE_FEATURE_DIMS[1], jnp.int32)],
        axis=1)
    out2 = jax.block_until_ready(encode(x2))
    ref2 = jnp.concatenate([w0[x2[:, 0]], w1[x2[:, 1]]], axis=1)
    assert out2.shape == (n2, emb_dim), out2.shape
    assert jnp.allclose(out2, ref2, atol=1e-5), "mismatch vs reference (tiled)"

    # Bit-faithful path (single f32 dot, lax.Precision.HIGHEST pinned).
    encode_exact = make_node_encoder_2f(w0, w1, exact=True)
    out3 = jax.block_until_ready(encode_exact(x2))
    assert jnp.allclose(out3, ref2, atol=1e-6), "mismatch vs reference (exact)"

    print("KERNEL_OK")
</pallas_src>

<mosaic_0001>
module attributes {stable_mosaic.version = 11 : i64} {
  func.func @kernel(%arg0: i32, %arg1: memref<2x8xi32, #tpu.memory_space<vmem>>, %arg2: memref<160x128xbf16, #tpu.memory_space<vmem>>, %arg3: memref<160x128xbf16, #tpu.memory_space<vmem>>, %arg4: memref<2x128xf32, #tpu.memory_space<vmem>>) attributes {dimension_semantics = [#tpu.dimension_semantics<parallel>], iteration_bounds = array<i64: 1>, scalar_prefetch = 0 : i64, scratch_operands = 0 : i64, tpu.core_type = #tpu.core_type<tc>, window_params = [{transform_indices = @transform_0, window_bounds = array<i64: 2, 8>}, {pipeline_mode = #tpu.pipeline_mode<synchronous>, transform_indices = @transform_1, window_bounds = array<i64: 160, 128>}, {pipeline_mode = #tpu.pipeline_mode<synchronous>, transform_indices = @transform_2, window_bounds = array<i64: 160, 128>}, {transform_indices = @transform_3, window_bounds = array<i64: 2, 128>}]} {
    %c0 = arith.constant 0 : index
    %c0_0 = arith.constant 0 : index
    %0 = vector.load %arg1[%c0, %c0_0] : memref<2x8xi32, #tpu.memory_space<vmem>>, vector<2x8xi32>
    %1 = tpu.iota {dimensions = array<i32: 1>} : vector<2x160xi32>
    %2 = vector.extract_strided_slice %0 {offsets = [0, 0], sizes = [2, 1], strides = [1, 1]} : vector<2x8xi32> to vector<2x1xi32>
    %c0_i32 = arith.constant 0 : i32
    %3 = vector.broadcast %c0_i32 : i32 to vector<2x1xi32>
    %4 = arith.addi %2, %3 : vector<2x1xi32>
    %5 = vector.extract_strided_slice %0 {offsets = [0, 1], sizes = [2, 1], strides = [1, 1]} : vector<2x8xi32> to vector<2x1xi32>
    %c16_i32 = arith.constant 16 : i32
    %6 = vector.broadcast %c16_i32 : i32 to vector<2x1xi32>
    %7 = arith.addi %5, %6 : vector<2x1xi32>
    %8 = vector.broadcast %4 : vector<2x1xi32> to vector<2x160xi32>
    %9 = arith.cmpi eq, %1, %8 : vector<2x160xi32>
    %10 = vector.broadcast %7 : vector<2x1xi32> to vector<2x160xi32>
    %11 = arith.cmpi eq, %1, %10 : vector<2x160xi32>
    %12 = arith.ori %9, %11 : vector<2x160xi1>
    %13 = vector.extract_strided_slice %0 {offsets = [0, 2], sizes = [2, 1], strides = [1, 1]} : vector<2x8xi32> to vector<2x1xi32>
    %c40_i32 = arith.constant 40 : i32
    %14 = vector.broadcast %c40_i32 : i32 to vector<2x1xi32>
    %15 = arith.addi %13, %14 : vector<2x1xi32>
    %16 = vector.extract_strided_slice %0 {offsets = [0, 3], sizes = [2, 1], strides = [1, 1]} : vector<2x8xi32> to vector<2x1xi32>
    %c56_i32 = arith.constant 56 : i32
    %17 = vector.broadcast %c56_i32 : i32 to vector<2x1xi32>
    %18 = arith.addi %16, %17 : vector<2x1xi32>
    %19 = vector.broadcast %15 : vector<2x1xi32> to vector<2x160xi32>
    %20 = arith.cmpi eq, %1, %19 : vector<2x160xi32>
    %21 = vector.broadcast %18 : vector<2x1xi32> to vector<2x160xi32>
    %22 = arith.cmpi eq, %1, %21 : vector<2x160xi32>
    %23 = arith.ori %20, %22 : vector<2x160xi1>
    %24 = arith.ori %12, %23 : vector<2x160xi1>
    %25 = vector.extract_strided_slice %0 {offsets = [0, 4], sizes = [2, 1], strides = [1, 1]} : vector<2x8xi32> to vector<2x1xi32>
    %c80_i32 = arith.constant 80 : i32
    %26 = vector.broadcast %c80_i32 : i32 to vector<2x1xi32>
    %27 = arith.addi %25, %26 : vector<2x1xi32>
    %28 = vector.extract_strided_slice %0 {offsets = [0, 5], sizes = [2, 1], strides = [1, 1]} : vector<2x8xi32> to vector<2x1xi32>
    %c96_i32 = arith.constant 96 : i32
    %29 = vector.broadcast %c96_i32 : i32 to vector<2x1xi32>
    %30 = arith.addi %28, %29 : vector<2x1xi32>
    %31 = vector.broadcast %27 : vector<2x1xi32> to vector<2x160xi32>
    %32 = arith.cmpi eq, %1, %31 : vector<2x160xi32>
    %33 = vector.broadcast %30 : vector<2x1xi32> to vector<2x160xi32>
    %34 = arith.cmpi eq, %1, %33 : vector<2x160xi32>
    %35 = arith.ori %32, %34 : vector<2x160xi1>
    %36 = arith.ori %24, %35 : vector<2x160xi1>
    %37 = vector.extract_strided_slice %0 {offsets = [0, 6], sizes = [2, 1], strides = [1, 1]} : vector<2x8xi32> to vector<2x1xi32>
    %c120_i32 = arith.constant 120 : i32
    %38 = vector.broadcast %c120_i32 : i32 to vector<2x1xi32>
    %39 = arith.addi %37, %38 : vector<2x1xi32>
    %40 = vector.extract_strided_slice %0 {offsets = [0, 7], sizes = [2, 1], strides = [1, 1]} : vector<2x8xi32> to vector<2x1xi32>
    %c136_i32 = arith.constant 136 : i32
    %41 = vector.broadcast %c136_i32 : i32 to vector<2x1xi32>
    %42 = arith.addi %40, %41 : vector<2x1xi32>
    %43 = vector.broadcast %39 : vector<2x1xi32> to vector<2x160xi32>
    %44 = arith.cmpi eq, %1, %43 : vector<2x160xi32>
    %45 = vector.broadcast %42 : vector<2x1xi32> to vector<2x160xi32>
    %46 = arith.cmpi eq, %1, %45 : vector<2x160xi32>
    %47 = arith.ori %44, %46 : vector<2x160xi1>
    %48 = arith.ori %36, %47 : vector<2x160xi1>
    %49 = arith.extui %48 : vector<2x160xi1> to vector<2x160xi32>
    %50 = arith.sitofp %49 : vector<2x160xi32> to vector<2x160xf32>
    %51 = arith.truncf %50 : vector<2x160xf32> to vector<2x160xbf16>
    %c0_1 = arith.constant 0 : index
    %c0_2 = arith.constant 0 : index
    %52 = vector.load %arg2[%c0_1, %c0_2] : memref<160x128xbf16, #tpu.memory_space<vmem>>, vector<160x128xbf16>
    %cst = arith.constant dense<0.000000e+00> : vector<2x128xf32>
    %53 = tpu.matmul %51, %52, %cst {dimension_numbers = #tpu.dot_dimension_numbers<[1], [0], [0], [1], [0, 0, 1, 1], [], []>} : vector<2x160xbf16>, vector<160x128xbf16>, vector<2x128xf32> -> vector<2x128xf32>
    %c0_3 = arith.constant 0 : index
    %c0_4 = arith.constant 0 : index
    %54 = vector.load %arg3[%c0_3, %c0_4] : memref<160x128xbf16, #tpu.memory_space<vmem>>, vector<160x128xbf16>
    %cst_5 = arith.constant dense<0.000000e+00> : vector<2x128xf32>
    %55 = tpu.matmul %51, %54, %cst_5 {dimension_numbers = #tpu.dot_dimension_numbers<[1], [0], [0], [1], [0, 0, 1, 1], [], []>} : vector<2x160xbf16>, vector<160x128xbf16>, vector<2x128xf32> -> vector<2x128xf32>
    %56 = arith.addf %53, %55 : vector<2x128xf32>
    %c0_6 = arith.constant 0 : index
    %c0_7 = arith.constant 0 : index
    %57 = vector.load %arg4[%c0_6, %c0_7] : memref<2x128xf32, #tpu.memory_space<vmem>>, vector<2x128xf32>
    tpu.vector_store %arg4[%c0_6, %c0_7], %56 {strides = array<i32>} : memref<2x128xf32, #tpu.memory_space<vmem>>, vector<2x128xf32>,
    return
  }
  func.func @transform_0(%arg0: i32) -> (i32, i32) {
    %c0_i32 = arith.constant 0 : i32
    %c0_i32_0 = arith.constant 0 : i32
    return %arg0, %c0_i32 : i32, i32
  }
  func.func @transform_1(%arg0: i32) -> (i32, i32) {
    %c0_i32 = arith.constant 0 : i32
    %c0_i32_0 = arith.constant 0 : i32
    %c0_i32_1 = arith.constant 0 : i32
    return %c0_i32, %c0_i32_0 : i32, i32
  }
  func.func @transform_2(%arg0: i32) -> (i32, i32) {
    %c0_i32 = arith.constant 0 : i32
    %c0_i32_0 = arith.constant 0 : i32
    %c0_i32_1 = arith.constant 0 : i32
    return %c0_i32, %c0_i32_0 : i32, i32
  }
  func.func @transform_3(%arg0: i32) -> (i32, i32) {
    %c0_i32 = arith.constant 0 : i32
    %c0_i32_0 = arith.constant 0 : i32
    return %arg0, %c0_i32 : i32, i32
  }
}

</mosaic_0001>

<llo_original>
// kernel: encode.1
$region0: #{encode.1}
  #allocation0 [shape = 'u32[]', space=smem, size = 0x4, offset = 0x4, fixed_abs, tag = 'smem constant byte address 0x4 - core index']
  #allocation1 [shape = 'u32[144,128]{1,0:T(1,128)}', space=vmem, size = 0x12000, scoped, tag = 'internal scratch']
  %s0 = inlined_call_operand.vmem [shape: s32[2,8], index: 0, kind: input, shape index: {}]
  %s1 = inlined_call_operand.hbm [shape: bf16[160,128], index: 1, kind: input, shape index: {}]
  %s2 = inlined_call_operand.hbm [shape: bf16[160,128], index: 2, kind: input, shape index: {}]
  %s3 = inlined_call_operand.vmem [shape: f32[2,128], index: 3, kind: output, shape index: {}]
  %s4 = sld [smem:[#allocation0]]
  $region30: #{encode.1} parent=0
    _
  %s6 = ssub.s32 1, %s4
  %s7 = scalar_select 0, %s6, %s4
  $region1: #{encode.1} parent=0
    #allocation2 [shape = 'u8[40960]{0}', space=vmem, size = 0xa000, scoped, tag = 'input window, operand 1, single buffered']
    #allocation3 [shape = 's32[1]{0}', space=sflag, size = 0x4, scoped, tag = 'scoped memory for encode.1']
    #allocation4 [shape = 'u8[40960]{0}', space=vmem, size = 0xa000, scoped, tag = 'input window, operand 2, single buffered']
    #allocation5 [shape = 's32[1]{0}', space=sflag, size = 0x4, scoped, tag = 'scoped memory for encode.1']
    %8 = vsyncpa [#allocation3], 0
    %9 = vsyncpa [#allocation5], 0
    // Predicated region
    $region2: #{encode.1} parent=1 // pred_check
      _
    $region3: #{encode.1} parent=1 // pred_check_branch
      %11 = sbr.rel (0) target = $region5
    $region4: #{encode.1} parent=1 // pred_region
      _
    $region5: #{encode.1} parent=1 // pred_fallthru
      _
    // Predicated region
    $region6: #{encode.1} parent=1 // pred_check
      _
    $region7: #{encode.1} parent=1 // pred_check_branch
      %13 = sbr.rel (0) target = $region9
    $region8: #{encode.1} parent=1 // pred_region
      %s15 = ssub.s32 1280, 1280
      %16 = vsyncadd [#allocation3], %s15
      %s17 = sshll.u32 [#allocation2], 4
      %s18 = int_to_ptr.vmem [resolvable:$true] %s17
      %23 = dma.hbm_to_vmem [thread:$0]  %s1, 1280, %s18, [#allocation3], 64, 64, 4
    $region9: #{encode.1} parent=1 // pred_fallthru
      _
    // Predicated region
    $region10: #{encode.1} parent=1 // pred_check
      _
    $region11: #{encode.1} parent=1 // pred_check_branch
      %25 = sbr.rel (0) target = $region13
    $region12: #{encode.1} parent=1 // pred_region
      %s27 = ssub.s32 1280, 1280
      %28 = vsyncadd [#allocation5], %s27
      %s29 = sshll.u32 [#allocation4], 4
      %s30 = int_to_ptr.vmem [resolvable:$true] %s29
      %35 = dma.hbm_to_vmem [thread:$0]  %s2, 1280, %s30, [#allocation5], 64, 64, 4
    $region13: #{encode.1} parent=1 // pred_fallthru
      _
    // Predicated region
    $region14: #{encode.1} parent=1 // pred_check
      _
    $region15: #{encode.1} parent=1 // pred_check_branch
      %37 = sbr.rel (0) target = $region17
    $region16: #{encode.1} parent=1 // pred_region
      %38 = dma.done [#allocation3], 1280
    $region17: #{encode.1} parent=1 // pred_fallthru
      _
    // Predicated region
    $region18: #{encode.1} parent=1 // pred_check
      _
    $region19: #{encode.1} parent=1 // pred_check_branch
      %40 = sbr.rel (0) target = $region21
    $region20: #{encode.1} parent=1 // pred_region
      %41 = dma.done [#allocation5], 1280
    $region21: #{encode.1} parent=1 // pred_fallthru
      _
    %v43 = vld [vmem:[%s0] sm:$0x3]
    %v44 = vlaneseq
    %v45 = vand.u32 %v44, 127
    %v46 = vadd.s32 %v45, 128
    %v47 = vadd.s32 %v43, 16
    %48 = vset.pattern.permute.xlu0 0
    %49 = vperm.xlu0 %48, %v43
    %v50 = vpop.permute.xlu0 %49
    %vm51 = vcmp.eq.s32.totalorder %v45, %v50
    %vm52 = vcmp.eq.s32.totalorder %v46, %v50
    %53 = vset.pattern.permute.xlu0 1
    %54 = vperm.xlu0 %53, %v47
    %v55 = vpop.permute.xlu0 %54
    %vm56 = vcmp.eq.s32.totalorder %v45, %v55
    %vm57 = vcmp.eq.s32.totalorder %v46, %v55
    %vm58 = vmor %vm51, %vm56
    %vm59 = vmor %vm52, %vm57
    %v60 = vadd.s32 %v43, 40
    %v61 = vadd.s32 %v43, 56
    %62 = vset.pattern.permute.xlu0 2
    %63 = vperm.xlu0 %62, %v60
    %v64 = vpop.permute.xlu0 %63
    %vm65 = vcmp.eq.s32.totalorder %v45, %v64
    %vm66 = vcmp.eq.s32.totalorder %v46, %v64
    %67 = vset.pattern.permute.xlu0 3
    %68 = vperm.xlu0 %67, %v61
    %v69 = vpop.permute.xlu0 %68
    %vm70 = vcmp.eq.s32.totalorder %v45, %v69
    %vm71 = vcmp.eq.s32.totalorder %v46, %v69
    %vm72 = vmor %vm65, %vm70
    %vm73 = vmor %vm66, %vm71
    %vm74 = vmor %vm58, %vm72
    %vm75 = vmor %vm59, %vm73
    %v76 = vadd.s32 %v43, 80
    %v77 = vadd.s32 %v43, 96
    %78 = vset.pattern.permute.xlu0 4
    %79 = vperm.xlu0 %78, %v76
    %v80 = vpop.permute.xlu0 %79
    %vm81 = vcmp.eq.s32.totalorder %v45, %v80
    %vm82 = vcmp.eq.s32.totalorder %v46, %v80
    %83 = vset.pattern.permute.xlu0 5
    %84 = vperm.xlu0 %83, %v77
    %v85 = vpop.permute.xlu0 %84
    %vm86 = vcmp.eq.s32.totalorder %v45, %v85
    %vm87 = vcmp.eq.s32.totalorder %v46, %v85
    %vm88 = vmor %vm81, %vm86
    %vm89 = vmor %vm82, %vm87
    %vm90 = vmor %vm74, %vm88
    %vm91 = vmor %vm75, %vm89
    %v92 = vadd.s32 %v43, 120
    %v93 = vadd.s32 %v43, 136
    %94 = vset.pattern.permute.xlu0 6
    %95 = vperm.xlu0 %94, %v92
    %v96 = vpop.permute.xlu0 %95
    %vm97 = vcmp.eq.s32.totalorder %v45, %v96
    %vm98 = vcmp.eq.s32.totalorder %v46, %v96
    %99 = vset.pattern.permute.xlu0 7
    %100 = vperm.xlu0 %99, %v93
    %v101 = vpop.permute.xlu0 %100
    %vm102 = vcmp.eq.s32.totalorder %v45, %v101
    %vm103 = vcmp.eq.s32.totalorder %v46, %v101
    %vm104 = vmor %vm97, %vm102
    %vm105 = vmor %vm98, %vm103
    %vm106 = vmor %vm90, %vm104
    %vm107 = vmor %vm91, %vm105
    %v108 = vsel %vm106, 1, 0
    %v109 = vsel %vm107, 1, 0
    %v110 = vcvt.s32.f32 %v108
    %v111 = vcvt.s32.f32 %v109
    %v112 = vpack.c.bf16 %v110, %v110
    %v113 = vpack.c.bf16 %v111, %v111
    %v114 = vld [vmem:[#allocation2] sm:$0xf]
    %v115 = vld [vmem:[#allocation2 + $0x4] sm:$0xf]
    %v116 = vld [vmem:[#allocation2 + $0x8] sm:$0xf]
    %v117 = vld [vmem:[#allocation2 + $0xc] sm:$0xf]
    %v118 = vld [vmem:[#allocation2 + $0x10] sm:$0xf]
    %v119 = vld [vmem:[#allocation2 + $0x14] sm:$0xf]
    %v120 = vld [vmem:[#allocation2 + $0x18] sm:$0xf]
    %v121 = vld [vmem:[#allocation2 + $0x1c] sm:$0xf]
    %v122 = vld [vmem:[#allocation2 + $0x20] sm:$0xf]
    %v123 = vld [vmem:[#allocation2 + $0x24] sm:$0xf]
    %v124 = vld [vmem:[#allocation2 + $0x28] sm:$0xf]
    %v125 = vld [vmem:[#allocation2 + $0x2c] sm:$0xf]
    %v126 = vld [vmem:[#allocation2 + $0x30] sm:$0xf]
    %v127 = vld [vmem:[#allocation2 + $0x34] sm:$0xf]
    %v128 = vld [vmem:[#allocation2 + $0x38] sm:$0xf]
    %v129 = vld [vmem:[#allocation2 + $0x3c] sm:$0xf]
    %v130 = vld [vmem:[#allocation2 + $0x40] sm:$0xf]
    %v131 = vld [vmem:[#allocation2 + $0x44] sm:$0xf]
    %v132 = vld [vmem:[#allocation2 + $0x48] sm:$0xf]
    %v133 = vld [vmem:[#allocation2 + $0x4c] sm:$0xf]
    %v134 = vld [vmem:[#allocation4] sm:$0xf]
    %v135 = vld [vmem:[#allocation4 + $0x4] sm:$0xf]
    %v136 = vld [vmem:[#allocation4 + $0x8] sm:$0xf]
    %v137 = vld [vmem:[#allocation4 + $0xc] sm:$0xf]
    %v138 = vld [vmem:[#allocation4 + $0x10] sm:$0xf]
    %v139 = vld [vmem:[#allocation4 + $0x14] sm:$0xf]
    %v140 = vld [vmem:[#allocation4 + $0x18] sm:$0xf]
    %v141 = vld [vmem:[#allocation4 + $0x1c] sm:$0xf]
    %v142 = vld [vmem:[#allocation4 + $0x20] sm:$0xf]
    %v143 = vld [vmem:[#allocation4 + $0x24] sm:$0xf]
    %v144 = vld [vmem:[#allocation4 + $0x28] sm:$0xf]
    %v145 = vld [vmem:[#allocation4 + $0x2c] sm:$0xf]
    %v146 = vld [vmem:[#allocation4 + $0x30] sm:$0xf]
    %v147 = vld [vmem:[#allocation4 + $0x34] sm:$0xf]
    %v148 = vld [vmem:[#allocation4 + $0x38] sm:$0xf]
    %v149 = vld [vmem:[#allocation4 + $0x3c] sm:$0xf]
    %v150 = vld [vmem:[#allocation4 + $0x40] sm:$0xf]
    %v151 = vld [vmem:[#allocation4 + $0x44] sm:$0xf]
    %v152 = vld [vmem:[#allocation4 + $0x48] sm:$0xf]
    %v153 = vld [vmem:[#allocation4 + $0x4c] sm:$0xf]
    %v174 = vunpack.c.l.b16 %v134
    %v175 = vunpack.c.l.b16 %v135
    %v176 = vunpack.c.l.b16 %v136
    %v177 = vunpack.c.l.b16 %v137
    %v178 = vunpack.c.l.b16 %v138
    %v179 = vunpack.c.l.b16 %v139
    %v180 = vunpack.c.l.b16 %v140
    %v181 = vunpack.c.l.b16 %v141
    %v182 = vunpack.c.l.b16 %v142
    %v183 = vunpack.c.l.b16 %v143
    %v184 = vunpack.c.l.b16 %v144
    %v185 = vunpack.c.l.b16 %v145
    %v186 = vunpack.c.l.b16 %v146
    %v187 = vunpack.c.l.b16 %v147
    %v188 = vunpack.c.l.b16 %v148
    %v189 = vunpack.c.l.b16 %v149
    %v190 = vunpack.c.l.b16 %v150
    %v191 = vunpack.c.l.b16 %v151
    %v192 = vunpack.c.l.b16 %v152
    %v193 = vunpack.c.l.b16 %v153
    %v194 = vpack.c.b16 %v175, %v174
    %v195 = vpack.c.b16 %v177, %v176
    %v196 = vpack.c.b16 %v179, %v178
    %v197 = vpack.c.b16 %v181, %v180
    %v198 = vpack.c.b16 %v183, %v182
    %v199 = vpack.c.b16 %v185, %v184
    %v200 = vpack.c.b16 %v187, %v186
    %v201 = vpack.c.b16 %v189, %v188
    %v202 = vpack.c.b16 %v191, %v190
    %v203 = vpack.c.b16 %v193, %v192
    %vm214 = vcmask 261120
    %v216 = vsel %vm214, %v113, 0
    %218 = vmatprep.subr.bf16.mxu0 0
    %219 = vmatpush1.bf16.msra.mxu0 %v194
    %220 = vmatprep.subr.bf16.mxu0 0
    %221 = vmatpush1.bf16.msra.mxu0 %v195
    %222 = vmatprep.subr.bf16.mxu0 0
    %223 = vmatpush1.bf16.msra.mxu0 %v196
    %224 = vmatprep.subr.bf16.mxu0 0
    %225 = vmatpush1.bf16.msra.mxu0 %v197
    %226 = vmatprep.subr.bf16.mxu0 0
    %227 = vmatpush1.bf16.msra.mxu0 %v198
    %228 = vmatprep.subr.bf16.mxu0 0
    %229 = vmatpush1.bf16.msra.mxu0 %v199
    %230 = vmatprep.subr.bf16.mxu0 0
    %231 = vmatpush1.bf16.msra.mxu0 %v200
    %232 = vmatprep.subr.bf16.mxu0 0
    %233 = vmatpush1.bf16.msra.mxu0 %v201
    %234 = vmatprep.subr.bf16.mxu0 0
    %235 = vmatpush1.bf16.msra.mxu0 %v202
    %236 = vmatprep.subr.bf16.mxu0 0
    %237 = vmatpush1.bf16.msra.mxu0 %v203
    %238 = vmatprep.subr.bf16.mxu0 0
    %239 = vmatpush1.bf16.msra.mxu0 0
    %240 = vmatprep.subr.bf16.mxu0 0
    %241 = vmatpush1.bf16.msra.mxu0 0
    %242 = vmatprep.subr.bf16.mxu0 0
    %243 = vmatpush1.bf16.msra.mxu0 0
    %244 = vmatprep.subr.bf16.mxu0 0
    %245 = vmatpush1.bf16.msra.mxu0 0
    %246 = vmatprep.subr.bf16.mxu0 0
    %247 = vmatpush1.bf16.msra.mxu0 0
    %248 = vmatprep.subr.bf16.mxu0 0
    %249 = vmatpush1.bf16.msra.mxu0 0
    %250 = vmatprep.mubr.bf16.mxu0 %v216
    %251 = vmatmul.mubr.bf16.gmra.mrb[0].mxu0 %v112
    %v252 = vpop.f32.mrb[0].mxu0
    %v253 = vadd.f32 0.0, %v252
    %v254 = vpop.f32.mrb[0].mxu0
    %v255 = vpop.f32.mrb[0].mxu0
    %v256 = vpop.f32.mrb[0].mxu0
    %257 = vdwg.mxu0
    %v278 = vunpack.c.l.b16 %v114
    %v279 = vunpack.c.l.b16 %v115
    %v280 = vunpack.c.l.b16 %v116
    %v281 = vunpack.c.l.b16 %v117
    %v282 = vunpack.c.l.b16 %v118
    %v283 = vunpack.c.l.b16 %v119
    %v284 = vunpack.c.l.b16 %v120
    %v285 = vunpack.c.l.b16 %v121
    %v286 = vunpack.c.l.b16 %v122
    %v287 = vunpack.c.l.b16 %v123
    %v288 = vunpack.c.l.b16 %v124
    %v289 = vunpack.c.l.b16 %v125
    %v290 = vunpack.c.l.b16 %v126
    %v291 = vunpack.c.l.b16 %v127
    %v292 = vunpack.c.l.b16 %v128
    %v293 = vunpack.c.l.b16 %v129
    %v294 = vunpack.c.l.b16 %v130
    %v295 = vunpack.c.l.b16 %v131
    %v296 = vunpack.c.l.b16 %v132
    %v297 = vunpack.c.l.b16 %v133
    %v298 = vpack.c.b16 %v279, %v278
    %v299 = vpack.c.b16 %v281, %v280
    %v300 = vpack.c.b16 %v283, %v282
    %v301 = vpack.c.b16 %v285, %v284
    %v302 = vpack.c.b16 %v287, %v286
    %v303 = vpack.c.b16 %v289, %v288
    %v304 = vpack.c.b16 %v291, %v290
    %v305 = vpack.c.b16 %v293, %v292
    %v306 = vpack.c.b16 %v295, %v294
    %v307 = vpack.c.b16 %v297, %v296
    %318 = vmatprep.subr.bf16.mxu0 0
    %319 = vmatpush1.bf16.msra.mxu0 %v298
    %320 = vmatprep.subr.bf16.mxu0 0
    %321 = vmatpush1.bf16.msra.mxu0 %v299
    %322 = vmatprep.subr.bf16.mxu0 0
    %323 = vmatpush1.bf16.msra.mxu0 %v300
    %324 = vmatprep.subr.bf16.mxu0 0
    %325 = vmatpush1.bf16.msra.mxu0 %v301
    %326 = vmatprep.subr.bf16.mxu0 0
    %327 = vmatpush1.bf16.msra.mxu0 %v302
    %328 = vmatprep.subr.bf16.mxu0 0
    %329 = vmatpush1.bf16.msra.mxu0 %v303
    %330 = vmatprep.subr.bf16.mxu0 0
    %331 = vmatpush1.bf16.msra.mxu0 %v304
    %332 = vmatprep.subr.bf16.mxu0 0
    %333 = vmatpush1.bf16.msra.mxu0 %v305
    %334 = vmatprep.subr.bf16.mxu0 0
    %335 = vmatpush1.bf16.msra.mxu0 %v306
    %336 = vmatprep.subr.bf16.mxu0 0
    %337 = vmatpush1.bf16.msra.mxu0 %v307
    %338 = vmatprep.subr.bf16.mxu0 0
    %339 = vmatpush1.bf16.msra.mxu0 0
    %340 = vmatprep.subr.bf16.mxu0 0
    %341 = vmatpush1.bf16.msra.mxu0 0
    %342 = vmatprep.subr.bf16.mxu0 0
    %343 = vmatpush1.bf16.msra.mxu0 0
    %344 = vmatprep.subr.bf16.mxu0 0
    %345 = vmatpush1.bf16.msra.mxu0 0
    %346 = vmatprep.subr.bf16.mxu0 0
    %347 = vmatpush1.bf16.msra.mxu0 0
    %348 = vmatprep.subr.bf16.mxu0 0
    %349 = vmatpush1.bf16.msra.mxu0 0
    %350 = vmatprep.mubr.bf16.mxu0 %v216
    %351 = vmatmul.mubr.bf16.gmra.mrb[0].mxu0 %v112
    %v352 = vpop.f32.mrb[0].mxu0
    %v353 = vadd.f32 %v253, %v352
    %v354 = vpop.f32.mrb[0].mxu0
    %v355 = vpop.f32.mrb[0].mxu0
    %v356 = vpop.f32.mrb[0].mxu0
    %357 = vdwg.mxu0
    %358 = vst [vmem:[%s3] sm:$0x3] %v353
    // Predicated region
    $region22: #{encode.1} parent=1 // pred_check
      _
    $region23: #{encode.1} parent=1 // pred_check_branch
      %360 = sbr.rel (0) target = $region25
    $region24: #{encode.1} parent=1 // pred_region
      _
    $region25: #{encode.1} parent=1 // pred_fallthru
      _
    // Predicated region
    $region26: #{encode.1} parent=1 // pred_check
      _
    $region27: #{encode.1} parent=1 // pred_check_branch
      %362 = sbr.rel (0) target = $region29
    $region28: #{encode.1} parent=1 // pred_region
      _
    $region29: #{encode.1} parent=1 // pred_fallthru
      _
    %363 = vsyncpa [#allocation3], 1
    %364 = vsyncpa [#allocation5], 1

</llo_original>
